<compile_context>
chip_gen: v7x
topology: tpu7x:2x2x1
jax: 0.10.0
libtpu: 0.0.40
codegen_flags: <defaults>
</compile_context>

<pallas_src>
import numpy as np
import jax
import jax.numpy as jnp
from jax.experimental import pallas as pl
from jax.experimental.pallas import tpu as pltpu

ALPHA_CELU = 0.06
BN_EPS = 1e-5


# --------------------------------------------------------------------------
# Shared math
# --------------------------------------------------------------------------
def _celu(x, alpha=ALPHA_CELU):
    # CELU(alpha): x if x > 0 else alpha*(exp(x/alpha)-1)
    return jnp.where(x > 0, x, alpha * (jnp.exp(jnp.minimum(x, 0.0) / alpha) - 1.0))


# --------------------------------------------------------------------------
# Pure-JAX reference (unfused, per-sample) -- used only for the correctness
# check; matches the PyTorch forward semantics.
# --------------------------------------------------------------------------
def _shift_matrix(L, off, dtype=jnp.float32):
    row = jax.lax.broadcasted_iota(jnp.int32, (L, L), 0)
    col = jax.lax.broadcasted_iota(jnp.int32, (L, L), 1)
    return (row == col + off).astype(dtype)


def _conv1d_same(x, w, pad):
    # x: (Cin, L), w: (K, Cout, Cin) -> (Cout, L), zero-padded "same" conv
    K, Cout, _ = w.shape
    L = x.shape[1]
    acc = jnp.zeros((Cout, L), jnp.float32)
    for k in range(K):
        S = _shift_matrix(L, k - pad)
        xs = jnp.dot(x, S, preferred_element_type=jnp.float32)
        acc = acc + jnp.dot(w[k], xs, preferred_element_type=jnp.float32)
    return acc


def expand_math(x, bn0_s, bn0_b, w1, b1):
    x = x * bn0_s + bn0_b
    h = jnp.dot(x, w1, preferred_element_type=jnp.float32) + b1
    return _celu(h)


def convnet_math(t, bn1_s, bn1_b, wa, bn2_s, bn2_b, wb, bb,
                 bn3_s, bn3_b, wc, bc, bn4_s, bn4_b, wd, bd,
                 pool_mat, bn5_s, bn5_b, w2, b2):
    B = t.shape[0]
    Ka = wa.shape[0]
    Kd = wd.shape[0]
    outs = []
    for b in range(B):
        xb = t[b]
        xb = xb * bn1_s + bn1_b
        y = _conv1d_same(xb, wa, Ka // 2)
        y = jnp.maximum(y, 0.0)
        y = jnp.dot(y, pool_mat, preferred_element_type=jnp.float32)
        y = y * bn2_s + bn2_b
        y = _conv1d_same(y, wb, 1) + bb
        y = jnp.maximum(y, 0.0)
        z = y * bn3_s + bn3_b
        z = _conv1d_same(z, wc, 1) + bc
        z = jnp.maximum(z, 0.0)
        z = z * bn4_s + bn4_b
        z = _conv1d_same(z, wd, Kd // 2) + bd
        z = jnp.maximum(z, 0.0)
        y = z * y
        L = y.shape[1]
        Lmp = (L + 2 * 1 - 4) // 2 + 1
        cols = []
        for j in range(Lmp):
            s = max(0, j * 2 - 1)
            e = min(L, j * 2 - 1 + 4)
            cols.append(jnp.max(y[:, s:e], axis=1, keepdims=True))
        p = jnp.concatenate(cols, axis=1)
        q = p * bn5_s + bn5_b
        s_b = jnp.sum(q * w2, axis=1, keepdims=True)
        s_b = jnp.sum(s_b, axis=0, keepdims=True)
        outs.append(s_b)
    return jnp.concatenate(outs, axis=0) + b2


def cnn_reference(x_num, params):
    (bn0_s, bn0_b, w1, b1, bn1_s, bn1_b, wa, bn2_s, bn2_b, wb, bb,
     bn3_s, bn3_b, wc, bc, bn4_s, bn4_b, wd, bd, pool_mat,
     bn5_s, bn5_b, w2, b2, dims) = params
    B = x_num.shape[0]
    h = expand_math(x_num, bn0_s, bn0_b, w1, b1)
    t = h.reshape(B, dims["C1"], dims["L1"])
    out = convnet_math(t, bn1_s, bn1_b, wa, bn2_s, bn2_b, wb, bb,
                       bn3_s, bn3_b, wc, bc, bn4_s, bn4_b, wd, bd,
                       pool_mat, bn5_s, bn5_b, w2, b2)
    return jnp.squeeze(out)


# --------------------------------------------------------------------------
# Fused Pallas kernel: whole forward pass as a short chain of batched matmuls.
# --------------------------------------------------------------------------
def cnn_fused_kernel(x_ref, w1_ref, b1_ref, wA_ref, bA_ref, wB_ref, bB_ref,
                     wC_ref, bC_ref, wD_ref, bD_ref, gcat_ref, w2_ref, b2_ref,
                     out_ref):
    f32 = jnp.float32
    x = x_ref[...]
    # expand: BN0 folded into W1/B1; Dropout = identity; CELU
    h = _celu(jnp.dot(x, w1_ref[...], preferred_element_type=f32) + b1_ref[...])
    # conv1 block: BN1+Conv(C1->C2) ; (AvgPool+BN2+Conv(C2->C2)+bias), each folded
    a = jnp.maximum(jnp.dot(h, wA_ref[...], preferred_element_type=f32) + bA_ref[...], 0.0)
    b = jnp.maximum(jnp.dot(a, wB_ref[...], preferred_element_type=f32) + bB_ref[...], 0.0)
    # conv2 block (two_stage): BN3+Conv ; BN4+Conv, folded
    c = jnp.maximum(jnp.dot(b, wC_ref[...], preferred_element_type=f32) + bC_ref[...], 0.0)
    d = jnp.maximum(jnp.dot(c, wD_ref[...], preferred_element_type=f32) + bD_ref[...], 0.0)
    y = d * b                                   # x = conv2(x) * x, (TB, C3*Lp1)
    # MaxPool1d(4,2,1): ONE wide 0/1-selection matmul for all 4 taps, then a
    # VPU max over the 4 contiguous column groups.  Valid because y >= 0
    # (product of two ReLU outputs), so 0-valued out-of-window candidates can
    # never win the max -- identical to torch's -inf padding.
    mc = jnp.dot(y, gcat_ref[...], preferred_element_type=f32)    # (TB, 4*P2)
    P2 = w2_ref.shape[-1]
    m = jnp.maximum(jnp.maximum(mc[:, 0 * P2:1 * P2], mc[:, 1 * P2:2 * P2]),
                    jnp.maximum(mc[:, 2 * P2:3 * P2], mc[:, 3 * P2:4 * P2]))
    # Flatten -> BN5 -> Linear(P2 -> 1), folded into w2/b2.  Done off the MXU:
    # VPU multiply + last-axis reduce (XLU), avoiding an N=1 matmul drain.
    s = jnp.sum(m * w2_ref[...], axis=-1, keepdims=True) + b2_ref[...]   # (TB, 1)
    # Lane-dense store: broadcast the per-row scalar across 128 lanes so the
    # output write is an unmasked full-width vst; wrapper slices column 0.
    out_ref[...] = jnp.broadcast_to(s, out_ref.shape)


def cnn_forward(x_num, fused, batch_tile=512):
    (W1, B1, WA, bA, WB, bB, WC, bC, WD, bD, Gcat, w2f, b2f) = fused
    B, F = x_num.shape

    # Batch tiling: full batch if small (single grid step); otherwise pad B to
    # a multiple of batch_tile (multiple of 8 -> satisfies sublane tiling).
    if B <= batch_tile:
        tb = B
        x_pad = x_num
    else:
        tb = batch_tile
        pad = (-B) % tb
        x_pad = jnp.pad(x_num, ((0, pad), (0, 0))) if pad else x_num
    Bp = x_pad.shape[0]
    grid = (Bp // tb,)

    def resident(arr):
        shape = arr.shape
        nd = len(shape)
        return pl.BlockSpec(shape, lambda i: (0,) * nd)

    weights = (W1, B1, WA, bA, WB, bB, WC, bC, WD, bD, Gcat, w2f, b2f)
    in_specs = [pl.BlockSpec((tb, F), lambda i: (i, 0))] + [resident(w) for w in weights]

    out = pl.pallas_call(
        cnn_fused_kernel,
        out_shape=jax.ShapeDtypeStruct((Bp, 128), jnp.float32),
        grid=grid,
        in_specs=in_specs,
        out_specs=pl.BlockSpec((tb, 128), lambda i: (i, 0)),
        compiler_params=pltpu.CompilerParams(
            dimension_semantics=("parallel",)),       # megacore-shardable on v7x
    )(x_pad, *weights)
    return jnp.squeeze(out[:B, 0:1])                   # torch.squeeze


# --------------------------------------------------------------------------
# Host-side parameter folding (done once; pure glue, no hot-path compute)
# --------------------------------------------------------------------------
def _conv_matrix(w, L, pad):
    # w: (K, Cout, Cin) -> dense operator W of shape (Cin*L, Cout*L) such that
    # y_flat = x_flat @ W reproduces the zero-padded "same" Conv1d.
    w = np.asarray(w, np.float32)
    K, Cout, Cin = w.shape
    W = np.zeros((Cin * L, Cout * L), np.float32)
    for k in range(K):
        off = k - pad
        for l in range(L):
            li = l + off
            if 0 <= li < L:
                W[li::L, l::L] += w[k].T        # rows cin*L+li, cols cout*L+l
    return W


def prepare_fused_params(params):
    (bn0_s, bn0_b, w1, b1, bn1_s, bn1_b, wa, bn2_s, bn2_b, wb, bb,
     bn3_s, bn3_b, wc, bc, bn4_s, bn4_b, wd, bd, pool_mat,
     bn5_s, bn5_b, w2, b2, dims) = params
    C1, L1 = dims["C1"], dims["L1"]
    K1, C2 = wa.shape[0], wa.shape[1]
    C3 = wd.shape[1]
    Lp1 = np.asarray(pool_mat).shape[1]
    Lmp = np.asarray(w2).shape[1]
    P2 = C3 * Lmp
    assert C2 == C3, "conv2(x) * x requires channel_2 == channel_3"

    # expand: fold BN0 into the (weight-normed) Linear
    w1n = np.asarray(w1, np.float32)
    W1 = np.asarray(bn0_s, np.float32).reshape(-1, 1) * w1n
    B1 = np.asarray(bn0_b, np.float32).reshape(1, -1) @ w1n + np.asarray(b1, np.float32)

    def rep(v, L):
        return np.repeat(np.asarray(v, np.float32).reshape(-1), L)

    # conv a: BN1 -> Conv1d(C1->C2, k=K1, pad=K1//2, bias=False)
    Wa_op = _conv_matrix(wa, L1, K1 // 2)                       # (C1*L1, C2*L1)
    WA = rep(bn1_s, L1)[:, None] * Wa_op
    bA = rep(bn1_b, L1)[None, :] @ Wa_op                        # (1, C2*L1)

    # AdaptiveAvgPool1d -> BN2 -> Conv1d(C2->C2, k=3, bias) folded together
    P_full = np.kron(np.eye(C2, dtype=np.float32), np.asarray(pool_mat, np.float32))
    Wb_op = _conv_matrix(wb, Lp1, wb.shape[0] // 2)             # (C2*Lp1, C2*Lp1)
    WB = P_full @ (rep(bn2_s, Lp1)[:, None] * Wb_op)
    bB = rep(bn2_b, Lp1)[None, :] @ Wb_op + rep(bb, Lp1)[None, :]

    # BN3 -> Conv1d(C2->C2, k=3, bias)
    Wc_op = _conv_matrix(wc, Lp1, wc.shape[0] // 2)
    WC = rep(bn3_s, Lp1)[:, None] * Wc_op
    bC = rep(bn3_b, Lp1)[None, :] @ Wc_op + rep(bc, Lp1)[None, :]

    # BN4 -> Conv1d(C2->C3, k=5, bias)
    Wd_op = _conv_matrix(wd, Lp1, wd.shape[0] // 2)             # (C2*Lp1, C3*Lp1)
    WD = rep(bn4_s, Lp1)[:, None] * Wd_op
    bD = rep(bn4_b, Lp1)[None, :] @ Wd_op + rep(bd, Lp1)[None, :]

    # MaxPool1d(kernel=4, stride=2, pad=1): four 0/1 selection matrices,
    # block-diagonal over channels (row-major flatten c*Lp1+l -> c*Lmp+j),
    # CONCATENATED along columns so the kernel needs a single wide matmul.
    # Requires the pooled tensor >= 0 (it is: product of two ReLU outputs).
    Gcat = np.zeros((C3 * Lp1, 4 * P2), np.float32)
    for t in range(4):
        g = np.zeros((Lp1, Lmp), np.float32)
        for j in range(Lmp):
            li = 2 * j - 1 + t
            if 0 <= li < Lp1:
                g[li, j] = 1.0
        Gcat[:, t * P2:(t + 1) * P2] = np.kron(np.eye(C3, dtype=np.float32), g)

    # BN5 -> Linear(P2 -> 1) folded, kept as a (1, P2) row for VPU mul + reduce
    w2f = (np.asarray(bn5_s, np.float32) * np.asarray(w2, np.float32)).reshape(1, -1)
    b2f = (np.asarray(b2, np.float32).reshape(1, 1)
           + np.sum(np.asarray(bn5_b, np.float32) * np.asarray(w2, np.float32)))

    to = lambda a: jnp.asarray(a, jnp.float32)
    return (to(W1), to(B1), to(WA), to(bA), to(WB), to(bB), to(WC), to(bC),
            to(WD), to(bD), to(Gcat), to(w2f), to(b2f))


# --------------------------------------------------------------------------
# Deterministic synthetic parameter init (shapes follow CNN.__init__)
# --------------------------------------------------------------------------
def _fold_bn(key, n):
    k1, k2, k3, k4 = jax.random.split(key, 4)
    gamma = jax.random.uniform(k1, (n,), jnp.float32, 0.5, 1.5)
    beta = 0.1 * jax.random.normal(k2, (n,), jnp.float32)
    mean = 0.1 * jax.random.normal(k3, (n,), jnp.float32)
    var = jax.random.uniform(k4, (n,), jnp.float32, 0.5, 1.5)
    scale = gamma / jnp.sqrt(var + BN_EPS)
    shift = beta - mean * scale
    return scale, shift


def init_params(key, F, H, C1, C2, C3, K1=5):
    L1 = H // C1                       # cha_1_reshape
    Lp1 = H // C1 // 2                 # cha_po_1
    Lmp = (Lp1 + 2 * 1 - 4) // 2 + 1   # length after MaxPool1d(4, 2, 1)
    P2 = (H // C1 // 2 // 2) * C3      # cha_po_2
    assert Lmp * C3 == P2

    keys = jax.random.split(key, 16)
    bn0_s, bn0_b = _fold_bn(keys[0], F)
    w1 = 0.1 * jax.random.normal(keys[1], (F, H), jnp.float32)   # Linear(F->H), weight-norm folded
    b1 = 0.1 * jax.random.normal(keys[2], (1, H), jnp.float32)
    bn1_s, bn1_b = _fold_bn(keys[3], C1)
    wa = 0.2 * jax.random.normal(keys[4], (K1, C2, C1), jnp.float32)
    bn2_s, bn2_b = _fold_bn(keys[5], C2)
    wb = 0.2 * jax.random.normal(keys[6], (3, C2, C2), jnp.float32)
    bb = 0.1 * jax.random.normal(keys[7], (C2, 1), jnp.float32)
    bn3_s, bn3_b = _fold_bn(keys[8], C2)
    wc = 0.2 * jax.random.normal(keys[9], (3, C2, C2), jnp.float32)
    bc = 0.1 * jax.random.normal(keys[10], (C2, 1), jnp.float32)
    bn4_s, bn4_b = _fold_bn(keys[11], C2)
    wd = 0.2 * jax.random.normal(keys[12], (5, C3, C2), jnp.float32)
    bd = 0.1 * jax.random.normal(keys[13], (C3, 1), jnp.float32)
    bn5_s_f, bn5_b_f = _fold_bn(keys[14], P2)
    w2 = 0.1 * jax.random.normal(keys[15], (P2,), jnp.float32)   # Linear(P2->1) weight
    b2 = jnp.full((1, 1), 0.05, jnp.float32)

    bn0_s = bn0_s.reshape(1, F); bn0_b = bn0_b.reshape(1, F)
    bn1_s = bn1_s.reshape(C1, 1); bn1_b = bn1_b.reshape(C1, 1)
    bn2_s = bn2_s.reshape(C2, 1); bn2_b = bn2_b.reshape(C2, 1)
    bn3_s = bn3_s.reshape(C2, 1); bn3_b = bn3_b.reshape(C2, 1)
    bn4_s = bn4_s.reshape(C2, 1); bn4_b = bn4_b.reshape(C2, 1)
    # flatten is row-major (C3, Lmp) -> c*Lmp + l, same as torch Flatten
    bn5_s = bn5_s_f.reshape(C3, Lmp); bn5_b = bn5_b_f.reshape(C3, Lmp)
    w2 = w2.reshape(C3, Lmp)

    # AdaptiveAvgPool1d(L1 -> Lp1) pooling matrix (PyTorch adaptive bin rule)
    A = np.zeros((L1, Lp1), np.float32)
    for j in range(Lp1):
        s = (j * L1) // Lp1
        e = -((-(j + 1) * L1) // Lp1)   # ceil((j+1)*L1/Lp1)
        A[s:e, j] = 1.0 / (e - s)
    pool_mat = jnp.asarray(A)

    dims = {"C1": C1, "L1": L1}
    return (bn0_s, bn0_b, w1, b1, bn1_s, bn1_b, wa, bn2_s, bn2_b, wb, bb,
            bn3_s, bn3_b, wc, bc, bn4_s, bn4_b, wd, bd, pool_mat,
            bn5_s, bn5_b, w2, b2, dims)


if __name__ == "__main__":
    # small shapes consistent with the module:
    # num_features=16, hidden_size=32, channel_1=4, channel_2=channel_3=8, kernel1=5
    B, F, H = 2, 16, 32
    C1, C2, C3, K1 = 4, 8, 8, 5

    key = jax.random.PRNGKey(0)
    kx, kp = jax.random.split(key)
    x_num = jax.random.normal(kx, (B, F), jnp.float32)
    params = init_params(kp, F, H, C1, C2, C3, K1)
    fused = prepare_fused_params(params)

    out = jax.block_until_ready(cnn_forward(x_num, fused))
    ref = jax.block_until_ready(cnn_reference(x_num, params))

    assert out.shape == (B,), out.shape
    if not np.allclose(np.asarray(out), np.asarray(ref), rtol=1e-4, atol=1e-4):
        raise AssertionError(f"Pallas output {out} != reference {ref}")
    print("KERNEL_OK")
</pallas_src>

<mosaic_0001>
module attributes {stable_mosaic.version = 11 : i64} {
  func.func @cnn_fused_kernel(%arg0: i32, %arg1: memref<2x16xf32, #tpu.memory_space<vmem>>, %arg2: memref<16x32xf32, #tpu.memory_space<vmem>>, %arg3: memref<1x32xf32, #tpu.memory_space<vmem>>, %arg4: memref<32x64xf32, #tpu.memory_space<vmem>>, %arg5: memref<1x64xf32, #tpu.memory_space<vmem>>, %arg6: memref<64x32xf32, #tpu.memory_space<vmem>>, %arg7: memref<1x32xf32, #tpu.memory_space<vmem>>, %arg8: memref<32x32xf32, #tpu.memory_space<vmem>>, %arg9: memref<1x32xf32, #tpu.memory_space<vmem>>, %arg10: memref<32x32xf32, #tpu.memory_space<vmem>>, %arg11: memref<1x32xf32, #tpu.memory_space<vmem>>, %arg12: memref<32x64xf32, #tpu.memory_space<vmem>>, %arg13: memref<1x16xf32, #tpu.memory_space<vmem>>, %arg14: memref<1x1xf32, #tpu.memory_space<vmem>>, %arg15: memref<2x128xf32, #tpu.memory_space<vmem>>) attributes {dimension_semantics = [#tpu.dimension_semantics<parallel>], iteration_bounds = array<i64: 1>, scalar_prefetch = 0 : i64, scratch_operands = 0 : i64, tpu.core_type = #tpu.core_type<tc>, window_params = [{transform_indices = @transform_0, window_bounds = array<i64: 2, 16>}, {pipeline_mode = #tpu.pipeline_mode<synchronous>, transform_indices = @transform_1, window_bounds = array<i64: 16, 32>}, {pipeline_mode = #tpu.pipeline_mode<synchronous>, transform_indices = @transform_2, window_bounds = array<i64: 1, 32>}, {pipeline_mode = #tpu.pipeline_mode<synchronous>, transform_indices = @transform_3, window_bounds = array<i64: 32, 64>}, {pipeline_mode = #tpu.pipeline_mode<synchronous>, transform_indices = @transform_4, window_bounds = array<i64: 1, 64>}, {pipeline_mode = #tpu.pipeline_mode<synchronous>, transform_indices = @transform_5, window_bounds = array<i64: 64, 32>}, {pipeline_mode = #tpu.pipeline_mode<synchronous>, transform_indices = @transform_6, window_bounds = array<i64: 1, 32>}, {pipeline_mode = #tpu.pipeline_mode<synchronous>, transform_indices = @transform_7, window_bounds = array<i64: 32, 32>}, {pipeline_mode = #tpu.pipeline_mode<synchronous>, transform_indices = @transform_8, window_bounds = array<i64: 1, 32>}, {pipeline_mode = #tpu.pipeline_mode<synchronous>, transform_indices = @transform_9, window_bounds = array<i64: 32, 32>}, {pipeline_mode = #tpu.pipeline_mode<synchronous>, transform_indices = @transform_10, window_bounds = array<i64: 1, 32>}, {pipeline_mode = #tpu.pipeline_mode<synchronous>, transform_indices = @transform_11, window_bounds = array<i64: 32, 64>}, {pipeline_mode = #tpu.pipeline_mode<synchronous>, transform_indices = @transform_12, window_bounds = array<i64: 1, 16>}, {pipeline_mode = #tpu.pipeline_mode<synchronous>, transform_indices = @transform_13, window_bounds = array<i64: 1, 1>}, {transform_indices = @transform_14, window_bounds = array<i64: 2, 128>}]} {
    %c0 = arith.constant 0 : index
    %c0_0 = arith.constant 0 : index
    %0 = vector.load %arg1[%c0, %c0_0] : memref<2x16xf32, #tpu.memory_space<vmem>>, vector<2x16xf32>
    %c0_1 = arith.constant 0 : index
    %c0_2 = arith.constant 0 : index
    %1 = vector.load %arg2[%c0_1, %c0_2] : memref<16x32xf32, #tpu.memory_space<vmem>>, vector<16x32xf32>
    %cst = arith.constant dense<0.000000e+00> : vector<2x32xf32>
    %2 = tpu.matmul %0, %1, %cst {dimension_numbers = #tpu.dot_dimension_numbers<[1], [0], [0], [1], [0, 0, 1, 1], [], []>} : vector<2x16xf32>, vector<16x32xf32>, vector<2x32xf32> -> vector<2x32xf32>
    %c0_3 = arith.constant 0 : index
    %c0_4 = arith.constant 0 : index
    %3 = vector.load %arg3[%c0_3, %c0_4] : memref<1x32xf32, #tpu.memory_space<vmem>>, vector<1x32xf32>
    %4 = vector.broadcast %3 : vector<1x32xf32> to vector<2x32xf32>
    %5 = arith.addf %2, %4 : vector<2x32xf32>
    %cst_5 = arith.constant 0.000000e+00 : f32
    %6 = vector.broadcast %cst_5 : f32 to vector<2x32xf32>
    %7 = arith.cmpf ogt, %5, %6 : vector<2x32xf32>
    %cst_6 = arith.constant 0.000000e+00 : f32
    %8 = vector.broadcast %cst_6 : f32 to vector<2x32xf32>
    %9 = arith.minimumf %5, %8 : vector<2x32xf32>
    %cst_7 = arith.constant 6.000000e-02 : f32
    %10 = vector.broadcast %cst_7 : f32 to vector<2x32xf32>
    %11 = arith.divf %9, %10 : vector<2x32xf32>
    %12 = math.exp %11 : vector<2x32xf32>
    %cst_8 = arith.constant 1.000000e+00 : f32
    %13 = vector.broadcast %cst_8 : f32 to vector<2x32xf32>
    %14 = arith.subf %12, %13 : vector<2x32xf32>
    %cst_9 = arith.constant 6.000000e-02 : f32
    %15 = vector.broadcast %cst_9 : f32 to vector<2x32xf32>
    %16 = arith.mulf %15, %14 : vector<2x32xf32>
    %17 = arith.select %7, %5, %16 : vector<2x32xi1>, vector<2x32xf32>
    %c0_10 = arith.constant 0 : index
    %c0_11 = arith.constant 0 : index
    %18 = vector.load %arg4[%c0_10, %c0_11] : memref<32x64xf32, #tpu.memory_space<vmem>>, vector<32x64xf32>
    %cst_12 = arith.constant dense<0.000000e+00> : vector<2x64xf32>
    %19 = tpu.matmul %17, %18, %cst_12 {dimension_numbers = #tpu.dot_dimension_numbers<[1], [0], [0], [1], [0, 0, 1, 1], [], []>} : vector<2x32xf32>, vector<32x64xf32>, vector<2x64xf32> -> vector<2x64xf32>
    %c0_13 = arith.constant 0 : index
    %c0_14 = arith.constant 0 : index
    %20 = vector.load %arg5[%c0_13, %c0_14] : memref<1x64xf32, #tpu.memory_space<vmem>>, vector<1x64xf32>
    %21 = vector.broadcast %20 : vector<1x64xf32> to vector<2x64xf32>
    %22 = arith.addf %19, %21 : vector<2x64xf32>
    %cst_15 = arith.constant 0.000000e+00 : f32
    %23 = vector.broadcast %cst_15 : f32 to vector<2x64xf32>
    %24 = arith.maximumf %22, %23 : vector<2x64xf32>
    %c0_16 = arith.constant 0 : index
    %c0_17 = arith.constant 0 : index
    %25 = vector.load %arg6[%c0_16, %c0_17] : memref<64x32xf32, #tpu.memory_space<vmem>>, vector<64x32xf32>
    %cst_18 = arith.constant dense<0.000000e+00> : vector<2x32xf32>
    %26 = tpu.matmul %24, %25, %cst_18 {dimension_numbers = #tpu.dot_dimension_numbers<[1], [0], [0], [1], [0, 0, 1, 1], [], []>} : vector<2x64xf32>, vector<64x32xf32>, vector<2x32xf32> -> vector<2x32xf32>
    %c0_19 = arith.constant 0 : index
    %c0_20 = arith.constant 0 : index
    %27 = vector.load %arg7[%c0_19, %c0_20] : memref<1x32xf32, #tpu.memory_space<vmem>>, vector<1x32xf32>
    %28 = vector.broadcast %27 : vector<1x32xf32> to vector<2x32xf32>
    %29 = arith.addf %26, %28 : vector<2x32xf32>
    %cst_21 = arith.constant 0.000000e+00 : f32
    %30 = vector.broadcast %cst_21 : f32 to vector<2x32xf32>
    %31 = arith.maximumf %29, %30 : vector<2x32xf32>
    %c0_22 = arith.constant 0 : index
    %c0_23 = arith.constant 0 : index
    %32 = vector.load %arg8[%c0_22, %c0_23] : memref<32x32xf32, #tpu.memory_space<vmem>>, vector<32x32xf32>
    %cst_24 = arith.constant dense<0.000000e+00> : vector<2x32xf32>
    %33 = tpu.matmul %31, %32, %cst_24 {dimension_numbers = #tpu.dot_dimension_numbers<[1], [0], [0], [1], [0, 0, 1, 1], [], []>} : vector<2x32xf32>, vector<32x32xf32>, vector<2x32xf32> -> vector<2x32xf32>
    %c0_25 = arith.constant 0 : index
    %c0_26 = arith.constant 0 : index
    %34 = vector.load %arg9[%c0_25, %c0_26] : memref<1x32xf32, #tpu.memory_space<vmem>>, vector<1x32xf32>
    %35 = vector.broadcast %34 : vector<1x32xf32> to vector<2x32xf32>
    %36 = arith.addf %33, %35 : vector<2x32xf32>
    %cst_27 = arith.constant 0.000000e+00 : f32
    %37 = vector.broadcast %cst_27 : f32 to vector<2x32xf32>
    %38 = arith.maximumf %36, %37 : vector<2x32xf32>
    %c0_28 = arith.constant 0 : index
    %c0_29 = arith.constant 0 : index
    %39 = vector.load %arg10[%c0_28, %c0_29] : memref<32x32xf32, #tpu.memory_space<vmem>>, vector<32x32xf32>
    %cst_30 = arith.constant dense<0.000000e+00> : vector<2x32xf32>
    %40 = tpu.matmul %38, %39, %cst_30 {dimension_numbers = #tpu.dot_dimension_numbers<[1], [0], [0], [1], [0, 0, 1, 1], [], []>} : vector<2x32xf32>, vector<32x32xf32>, vector<2x32xf32> -> vector<2x32xf32>
    %c0_31 = arith.constant 0 : index
    %c0_32 = arith.constant 0 : index
    %41 = vector.load %arg11[%c0_31, %c0_32] : memref<1x32xf32, #tpu.memory_space<vmem>>, vector<1x32xf32>
    %42 = vector.broadcast %41 : vector<1x32xf32> to vector<2x32xf32>
    %43 = arith.addf %40, %42 : vector<2x32xf32>
    %cst_33 = arith.constant 0.000000e+00 : f32
    %44 = vector.broadcast %cst_33 : f32 to vector<2x32xf32>
    %45 = arith.maximumf %43, %44 : vector<2x32xf32>
    %46 = arith.mulf %45, %31 : vector<2x32xf32>
    %c0_34 = arith.constant 0 : index
    %c0_35 = arith.constant 0 : index
    %47 = vector.load %arg12[%c0_34, %c0_35] : memref<32x64xf32, #tpu.memory_space<vmem>>, vector<32x64xf32>
    %cst_36 = arith.constant dense<0.000000e+00> : vector<2x64xf32>
    %48 = tpu.matmul %46, %47, %cst_36 {dimension_numbers = #tpu.dot_dimension_numbers<[1], [0], [0], [1], [0, 0, 1, 1], [], []>} : vector<2x32xf32>, vector<32x64xf32>, vector<2x64xf32> -> vector<2x64xf32>
    %49 = vector.extract_strided_slice %48 {offsets = [0, 0], sizes = [2, 16], strides = [1, 1]} : vector<2x64xf32> to vector<2x16xf32>
    %50 = vector.extract_strided_slice %48 {offsets = [0, 16], sizes = [2, 16], strides = [1, 1]} : vector<2x64xf32> to vector<2x16xf32>
    %51 = arith.maximumf %49, %50 : vector<2x16xf32>
    %52 = vector.extract_strided_slice %48 {offsets = [0, 32], sizes = [2, 16], strides = [1, 1]} : vector<2x64xf32> to vector<2x16xf32>
    %53 = vector.extract_strided_slice %48 {offsets = [0, 48], sizes = [2, 16], strides = [1, 1]} : vector<2x64xf32> to vector<2x16xf32>
    %54 = arith.maximumf %52, %53 : vector<2x16xf32>
    %55 = arith.maximumf %51, %54 : vector<2x16xf32>
    %c0_37 = arith.constant 0 : index
    %c0_38 = arith.constant 0 : index
    %56 = vector.load %arg13[%c0_37, %c0_38] : memref<1x16xf32, #tpu.memory_space<vmem>>, vector<1x16xf32>
    %57 = vector.broadcast %56 : vector<1x16xf32> to vector<2x16xf32>
    %58 = arith.mulf %55, %57 : vector<2x16xf32>
    %cst_39 = arith.constant dense<0.000000e+00> : vector<2xf32>
    %59 = vector.multi_reduction <add>, %58, %cst_39 [1] : vector<2x16xf32> to vector<2xf32>
    %60 = vector.shape_cast %59 : vector<2xf32> to vector<2x1xf32>
    %c0_40 = arith.constant 0 : index
    %c0_41 = arith.constant 0 : index
    %61 = vector.load %arg14[%c0_40, %c0_41] : memref<1x1xf32, #tpu.memory_space<vmem>>, vector<1x1xf32>
    %62 = vector.broadcast %61 : vector<1x1xf32> to vector<2x1xf32>
    %63 = arith.addf %60, %62 : vector<2x1xf32>
    %64 = vector.shape_cast %63 : vector<2x1xf32> to vector<2x1xf32>
    %65 = vector.broadcast %64 : vector<2x1xf32> to vector<2x128xf32>
    %c0_42 = arith.constant 0 : index
    %c0_43 = arith.constant 0 : index
    %66 = vector.load %arg15[%c0_42, %c0_43] : memref<2x128xf32, #tpu.memory_space<vmem>>, vector<2x128xf32>
    tpu.vector_store %arg15[%c0_42, %c0_43], %65 {strides = array<i32>} : memref<2x128xf32, #tpu.memory_space<vmem>>, vector<2x128xf32>,
    return
  }
  func.func @transform_0(%arg0: i32) -> (i32, i32) {
    %c0_i32 = arith.constant 0 : i32
    %c0_i32_0 = arith.constant 0 : i32
    return %arg0, %c0_i32 : i32, i32
  }
  func.func @transform_1(%arg0: i32) -> (i32, i32) {
    %c0_i32 = arith.constant 0 : i32
    %c0_i32_0 = arith.constant 0 : i32
    %c0_i32_1 = arith.constant 0 : i32
    return %c0_i32, %c0_i32_0 : i32, i32
  }
  func.func @transform_2(%arg0: i32) -> (i32, i32) {
    %c0_i32 = arith.constant 0 : i32
    %c0_i32_0 = arith.constant 0 : i32
    %c0_i32_1 = arith.constant 0 : i32
    return %c0_i32, %c0_i32_0 : i32, i32
  }
  func.func @transform_3(%arg0: i32) -> (i32, i32) {
    %c0_i32 = arith.constant 0 : i32
    %c0_i32_0 = arith.constant 0 : i32
    %c0_i32_1 = arith.constant 0 : i32
    return %c0_i32, %c0_i32_0 : i32, i32
  }
  func.func @transform_4(%arg0: i32) -> (i32, i32) {
    %c0_i32 = arith.constant 0 : i32
    %c0_i32_0 = arith.constant 0 : i32
    %c0_i32_1 = arith.constant 0 : i32
    return %c0_i32, %c0_i32_0 : i32, i32
  }
  func.func @transform_5(%arg0: i32) -> (i32, i32) {
    %c0_i32 = arith.constant 0 : i32
    %c0_i32_0 = arith.constant 0 : i32
    %c0_i32_1 = arith.constant 0 : i32
    return %c0_i32, %c0_i32_0 : i32, i32
  }
  func.func @transform_6(%arg0: i32) -> (i32, i32) {
    %c0_i32 = arith.constant 0 : i32
    %c0_i32_0 = arith.constant 0 : i32
    %c0_i32_1 = arith.constant 0 : i32
    return %c0_i32, %c0_i32_0 : i32, i32
  }
  func.func @transform_7(%arg0: i32) -> (i32, i32) {
    %c0_i32 = arith.constant 0 : i32
    %c0_i32_0 = arith.constant 0 : i32
    %c0_i32_1 = arith.constant 0 : i32
    return %c0_i32, %c0_i32_0 : i32, i32
  }
  func.func @transform_8(%arg0: i32) -> (i32, i32) {
    %c0_i32 = arith.constant 0 : i32
    %c0_i32_0 = arith.constant 0 : i32
    %c0_i32_1 = arith.constant 0 : i32
    return %c0_i32, %c0_i32_0 : i32, i32
  }
  func.func @transform_9(%arg0: i32) -> (i32, i32) {
    %c0_i32 = arith.constant 0 : i32
    %c0_i32_0 = arith.constant 0 : i32
    %c0_i32_1 = arith.constant 0 : i32
    return %c0_i32, %c0_i32_0 : i32, i32
  }
  func.func @transform_10(%arg0: i32) -> (i32, i32) {
    %c0_i32 = arith.constant 0 : i32
    %c0_i32_0 = arith.constant 0 : i32
    %c0_i32_1 = arith.constant 0 : i32
    return %c0_i32, %c0_i32_0 : i32, i32
  }
  func.func @transform_11(%arg0: i32) -> (i32, i32) {
    %c0_i32 = arith.constant 0 : i32
    %c0_i32_0 = arith.constant 0 : i32
    %c0_i32_1 = arith.constant 0 : i32
    return %c0_i32, %c0_i32_0 : i32, i32
  }
  func.func @transform_12(%arg0: i32) -> (i32, i32) {
    %c0_i32 = arith.constant 0 : i32
    %c0_i32_0 = arith.constant 0 : i32
    %c0_i32_1 = arith.constant 0 : i32
    return %c0_i32, %c0_i32_0 : i32, i32
  }
  func.func @transform_13(%arg0: i32) -> (i32, i32) {
    %c0_i32 = arith.constant 0 : i32
    %c0_i32_0 = arith.constant 0 : i32
    %c0_i32_1 = arith.constant 0 : i32
    return %c0_i32, %c0_i32_0 : i32, i32
  }
  func.func @transform_14(%arg0: i32) -> (i32, i32) {
    %c0_i32 = arith.constant 0 : i32
    %c0_i32_0 = arith.constant 0 : i32
    return %arg0, %c0_i32 : i32, i32
  }
}

</mosaic_0001>

<llo_original>
// kernel: tpu_custom_call.1
$region0: #{tpu_custom_call.1}
  #allocation0 [shape = 'u32[]', space=smem, size = 0x4, offset = 0x4, fixed_abs, tag = 'smem constant byte address 0x4 - core index']
  #allocation1 [shape = 'u32[144,128]{1,0:T(1,128)}', space=vmem, size = 0x12000, scoped, tag = 'internal scratch']
  #allocation2 [shape = 'f32[1,1]{1,0:T(1,128)S(1)}', space=vmem, size = 0x200, scoped, tag = 'scoped memory for tpu_custom_call.1']
  %s0 = inlined_call_operand.vmem [shape: f32[2,16], index: 0, kind: input, shape index: {}]
  %s1 = inlined_call_operand.hbm [shape: f32[16,32], index: 1, kind: input, shape index: {}]
  %s2 = inlined_call_operand.hbm [shape: f32[1,32], index: 2, kind: input, shape index: {}]
  %s3 = inlined_call_operand.vmem [shape: f32[32,64], index: 3, kind: input, shape index: {}]
  %s4 = inlined_call_operand.hbm [shape: f32[1,64], index: 4, kind: input, shape index: {}]
  %s5 = inlined_call_operand.vmem [shape: f32[64,32], index: 5, kind: input, shape index: {}]
  %s6 = inlined_call_operand.hbm [shape: f32[1,32], index: 6, kind: input, shape index: {}]
  %s7 = inlined_call_operand.vmem [shape: f32[32,32], index: 7, kind: input, shape index: {}]
  %s8 = inlined_call_operand.hbm [shape: f32[1,32], index: 8, kind: input, shape index: {}]
  %s9 = inlined_call_operand.vmem [shape: f32[32,32], index: 9, kind: input, shape index: {}]
  %s10 = inlined_call_operand.vmem [shape: f32[1,32], index: 10, kind: input, shape index: {}]
  %s11 = inlined_call_operand.vmem [shape: f32[32,64], index: 11, kind: input, shape index: {}]
  %s12 = inlined_call_operand.vmem [shape: f32[1,16], index: 12, kind: input, shape index: {}]
  %s13 = inlined_call_operand.<no memory space> [shape: f32[1,1], index: 13, kind: input, shape index: {}]
  %s14 = inlined_call_operand.hbm [shape: f32[2,128], index: 14, kind: output, shape index: {}]
  %s15 = sld [smem:[#allocation0]]
  $region86: #{tpu_custom_call.1} parent=0
    _
  %s17 = ssub.s32 1, %s15
  %s18 = scalar_select 0, %s17, %s15
  %v19 = vstv %s13
  %20 = vst [vmem:[#allocation2] sm:$0x1] %v19
  $region1: #{tpu_custom_call.1} parent=0
    #allocation3 [shape = 'u8[8192]{0}', space=vmem, size = 0x2000, scoped, tag = 'input window, operand 1, single buffered']
    #allocation4 [shape = 's32[1]{0}', space=sflag, size = 0x4, scoped, tag = 'scoped memory for tpu_custom_call.1']
    #allocation5 [shape = 's32[1]{0}', space=sflag, size = 0x4, scoped, tag = 'scoped memory for tpu_custom_call.1']
    #allocation6 [shape = 'u8[512]{0}', space=vmem, size = 0x400, scoped, tag = 'input window, operand 2, single buffered']
    #allocation7 [shape = 's32[1]{0}', space=sflag, size = 0x4, scoped, tag = 'scoped memory for tpu_custom_call.1']
    #allocation8 [shape = 'u8[512]{0}', space=vmem, size = 0x400, scoped, tag = 'input window, operand 4, single buffered']
    #allocation9 [shape = 'u8[512]{0}', space=vmem, size = 0x400, scoped, tag = 'input window, operand 6, single buffered']
    #allocation10 [shape = 's32[1]{0}', space=sflag, size = 0x4, scoped, tag = 'scoped memory for tpu_custom_call.1']
    #allocation11 [shape = 'u8[512]{0}', space=vmem, size = 0x400, scoped, tag = 'input window, operand 8, single buffered']
    #allocation12 [shape = 'u8[1024]{0}', space=vmem, size = 0x400, scoped, tag = 'output window, operand 0, single buffered']
    %21 = vsyncpa [#allocation4], 0
    %22 = vsyncpa [#allocation7], 0
    %23 = vsyncpa [#allocation10], 0
    %24 = vsyncpa [#allocation5], 0
    // Predicated region
    $region2: #{tpu_custom_call.1} parent=1 // pred_check
      _
    $region3: #{tpu_custom_call.1} parent=1 // pred_check_branch
      %26 = sbr.rel (0) target = $region5
    $region4: #{tpu_custom_call.1} parent=1 // pred_region
      _
    $region5: #{tpu_custom_call.1} parent=1 // pred_fallthru
      _
    // Predicated region
    $region6: #{tpu_custom_call.1} parent=1 // pred_check
      _
    $region7: #{tpu_custom_call.1} parent=1 // pred_check_branch
      %28 = sbr.rel (0) target = $region9
    $region8: #{tpu_custom_call.1} parent=1 // pred_region
      %s30 = ssub.s32 256, 256
      %31 = vsyncadd [#allocation4], %s30
      %s32 = sshll.u32 [#allocation3], 4
      %s33 = int_to_ptr.vmem [resolvable:$true] %s32
      %38 = dma.hbm_to_vmem [thread:$0]  %s1, 256, %s33, [#allocation4], 128, 128, 8
    $region9: #{tpu_custom_call.1} parent=1 // pred_fallthru
      _
    // Predicated region
    $region10: #{tpu_custom_call.1} parent=1 // pred_check
      _
    $region11: #{tpu_custom_call.1} parent=1 // pred_check_branch
      %40 = sbr.rel (0) target = $region13
    $region12: #{tpu_custom_call.1} parent=1 // pred_region
      %s42 = ssub.s32 16, 16
      %43 = vsyncadd [#allocation7], %s42
      %s45 = sshll.u32 [#allocation6], 4
      %s46 = int_to_ptr.vmem [resolvable:$true] %s45
      %48 = dma.hbm_to_vmem [thread:$0]  %s2, 16, %s46, [#allocation7]
    $region13: #{tpu_custom_call.1} parent=1 // pred_fallthru
      _
    // Predicated region
    $region14: #{tpu_custom_call.1} parent=1 // pred_check
      _
    $region15: #{tpu_custom_call.1} parent=1 // pred_check_branch
      %50 = sbr.rel (0) target = $region17
    $region16: #{tpu_custom_call.1} parent=1 // pred_region
      _
    $region17: #{tpu_custom_call.1} parent=1 // pred_fallthru
      _
    // Predicated region
    $region18: #{tpu_custom_call.1} parent=1 // pred_check
      _
    $region19: #{tpu_custom_call.1} parent=1 // pred_check_branch
      %52 = sbr.rel (0) target = $region21
    $region20: #{tpu_custom_call.1} parent=1 // pred_region
      %s54 = ssub.s32 16, 16
      %55 = vsyncadd [#allocation7], %s54
      %s57 = sshll.u32 [#allocation8], 4
      %s58 = int_to_ptr.vmem [resolvable:$true] %s57
      %60 = dma.hbm_to_vmem [thread:$0]  %s4, 16, %s58, [#allocation7]
    $region21: #{tpu_custom_call.1} parent=1 // pred_fallthru
      _
    // Predicated region
    $region22: #{tpu_custom_call.1} parent=1 // pred_check
      _
    $region23: #{tpu_custom_call.1} parent=1 // pred_check_branch
      %62 = sbr.rel (0) target = $region25
    $region24: #{tpu_custom_call.1} parent=1 // pred_region
      _
    $region25: #{tpu_custom_call.1} parent=1 // pred_fallthru
      _
    // Predicated region
    $region26: #{tpu_custom_call.1} parent=1 // pred_check
      _
    $region27: #{tpu_custom_call.1} parent=1 // pred_check_branch
      %64 = sbr.rel (0) target = $region29
    $region28: #{tpu_custom_call.1} parent=1 // pred_region
      %s66 = ssub.s32 16, 16
      %67 = vsyncadd [#allocation10], %s66
      %s69 = sshll.u32 [#allocation9], 4
      %s70 = int_to_ptr.vmem [resolvable:$true] %s69
      %72 = dma.hbm_to_vmem [thread:$0]  %s6, 16, %s70, [#allocation10]
    $region29: #{tpu_custom_call.1} parent=1 // pred_fallthru
      _
    // Predicated region
    $region30: #{tpu_custom_call.1} parent=1 // pred_check
      _
    $region31: #{tpu_custom_call.1} parent=1 // pred_check_branch
      %74 = sbr.rel (0) target = $region33
    $region32: #{tpu_custom_call.1} parent=1 // pred_region
      _
    $region33: #{tpu_custom_call.1} parent=1 // pred_fallthru
      _
    // Predicated region
    $region34: #{tpu_custom_call.1} parent=1 // pred_check
      _
    $region35: #{tpu_custom_call.1} parent=1 // pred_check_branch
      %76 = sbr.rel (0) target = $region37
    $region36: #{tpu_custom_call.1} parent=1 // pred_region
      %s78 = ssub.s32 16, 16
      %79 = vsyncadd [#allocation10], %s78
      %s81 = sshll.u32 [#allocation11], 4
      %s82 = int_to_ptr.vmem [resolvable:$true] %s81
      %84 = dma.hbm_to_vmem [thread:$0]  %s8, 16, %s82, [#allocation10]
    $region37: #{tpu_custom_call.1} parent=1 // pred_fallthru
      _
    // Predicated region
    $region38: #{tpu_custom_call.1} parent=1 // pred_check
      _
    $region39: #{tpu_custom_call.1} parent=1 // pred_check_branch
      %86 = sbr.rel (0) target = $region41
    $region40: #{tpu_custom_call.1} parent=1 // pred_region
      _
    $region41: #{tpu_custom_call.1} parent=1 // pred_fallthru
      _
    // Predicated region
    $region42: #{tpu_custom_call.1} parent=1 // pred_check
      _
    $region43: #{tpu_custom_call.1} parent=1 // pred_check_branch
      %88 = sbr.rel (0) target = $region45
    $region44: #{tpu_custom_call.1} parent=1 // pred_region
      _
    $region45: #{tpu_custom_call.1} parent=1 // pred_fallthru
      _
    // Predicated region
    $region46: #{tpu_custom_call.1} parent=1 // pred_check
      _
    $region47: #{tpu_custom_call.1} parent=1 // pred_check_branch
      %90 = sbr.rel (0) target = $region49
    $region48: #{tpu_custom_call.1} parent=1 // pred_region
      _
    $region49: #{tpu_custom_call.1} parent=1 // pred_fallthru
      _
    // Predicated region
    $region50: #{tpu_custom_call.1} parent=1 // pred_check
      _
    $region51: #{tpu_custom_call.1} parent=1 // pred_check_branch
      %92 = sbr.rel (0) target = $region53
    $region52: #{tpu_custom_call.1} parent=1 // pred_region
      _
    $region53: #{tpu_custom_call.1} parent=1 // pred_fallthru
      _
    // Predicated region
    $region54: #{tpu_custom_call.1} parent=1 // pred_check
      _
    $region55: #{tpu_custom_call.1} parent=1 // pred_check_branch
      %94 = sbr.rel (0) target = $region57
    $region56: #{tpu_custom_call.1} parent=1 // pred_region
      _
    $region57: #{tpu_custom_call.1} parent=1 // pred_fallthru
      _
    // Predicated region
    $region58: #{tpu_custom_call.1} parent=1 // pred_check
      _
    $region59: #{tpu_custom_call.1} parent=1 // pred_check_branch
      %96 = sbr.rel (0) target = $region61
    $region60: #{tpu_custom_call.1} parent=1 // pred_region
      %97 = dma.done [#allocation4], 256
    $region61: #{tpu_custom_call.1} parent=1 // pred_fallthru
      _
    // Predicated region
    $region62: #{tpu_custom_call.1} parent=1 // pred_check
      _
    $region63: #{tpu_custom_call.1} parent=1 // pred_check_branch
      %99 = sbr.rel (0) target = $region65
    $region64: #{tpu_custom_call.1} parent=1 // pred_region
      %100 = dma.done [#allocation7], 16
    $region65: #{tpu_custom_call.1} parent=1 // pred_fallthru
      _
    // Predicated region
    $region66: #{tpu_custom_call.1} parent=1 // pred_check
      _
    $region67: #{tpu_custom_call.1} parent=1 // pred_check_branch
      %102 = sbr.rel (0) target = $region69
    $region68: #{tpu_custom_call.1} parent=1 // pred_region
      %103 = dma.done [#allocation7], 16
    $region69: #{tpu_custom_call.1} parent=1 // pred_fallthru
      _
    // Predicated region
    $region70: #{tpu_custom_call.1} parent=1 // pred_check
      _
    $region71: #{tpu_custom_call.1} parent=1 // pred_check_branch
      %105 = sbr.rel (0) target = $region73
    $region72: #{tpu_custom_call.1} parent=1 // pred_region
      %106 = dma.done [#allocation10], 16
    $region73: #{tpu_custom_call.1} parent=1 // pred_fallthru
      _
    // Predicated region
    $region74: #{tpu_custom_call.1} parent=1 // pred_check
      _
    $region75: #{tpu_custom_call.1} parent=1 // pred_check_branch
      %108 = sbr.rel (0) target = $region77
    $region76: #{tpu_custom_call.1} parent=1 // pred_region
      %109 = dma.done [#allocation10], 16
    $region77: #{tpu_custom_call.1} parent=1 // pred_fallthru
      _
    %v110 = vld [vmem:[%s0] sm:$0x3]
    %v111 = vld [vmem:[#allocation3] sm:$0xff]
    %v112 = vld [vmem:[#allocation3 + $0x8] sm:$0xff]
    %v113 = vld [vmem:[#allocation6] sm:$0x1]
    %v115 = vlaneseq
    %v116 = vshrl.u32 %v115, 7
    %v117 = vsub.s32 0, %v116
    %v118 = vrot.slane %v113, %v117
    %vm120 = vcmask 130048
    %v122 = vsel %vm120, %v110, 0
    %124 = vmatprep.subr.mxu0 0.0
    %125 = vmatpush1.msra.mxu0 %v111
    %126 = vmatprep.subr.mxu0 0.0
    %127 = vmatpush1.msra.mxu0 %v112
    %128 = vmatprep.subr.mxu0 0.0
    %129 = vmatpush1.msra.mxu0 0.0
    %130 = vmatprep.subr.mxu0 0.0
    %131 = vmatpush1.msra.mxu0 0.0
    %132 = vmatprep.subr.mxu0 0.0
    %133 = vmatpush1.msra.mxu0 0.0
    %134 = vmatprep.subr.mxu0 0.0
    %135 = vmatpush1.msra.mxu0 0.0
    %136 = vmatprep.subr.mxu0 0.0
    %137 = vmatpush1.msra.mxu0 0.0
    %138 = vmatprep.subr.mxu0 0.0
    %139 = vmatpush1.msra.mxu0 0.0
    %140 = vmatprep.subr.mxu0 0.0
    %141 = vmatpush1.msra.mxu0 0.0
    %142 = vmatprep.subr.mxu0 0.0
    %143 = vmatpush1.msra.mxu0 0.0
    %144 = vmatprep.subr.mxu0 0.0
    %145 = vmatpush1.msra.mxu0 0.0
    %146 = vmatprep.subr.mxu0 0.0
    %147 = vmatpush1.msra.mxu0 0.0
    %148 = vmatprep.subr.mxu0 0.0
    %149 = vmatpush1.msra.mxu0 0.0
    %150 = vmatprep.subr.mxu0 0.0
    %151 = vmatpush1.msra.mxu0 0.0
    %152 = vmatprep.subr.mxu0 0.0
    %153 = vmatpush1.msra.mxu0 0.0
    %154 = vmatprep.subr.mxu0 0.0
    %155 = vmatpush1.msra.mxu0 0.0
    %156 = vmatprep.subr.mxu0 0.0
    %157 = vmatpush1.msra.mxu0 0.0
    %158 = vmatprep.subr.mxu0 0.0
    %159 = vmatpush1.msra.mxu0 0.0
    %160 = vmatprep.subr.mxu0 0.0
    %161 = vmatpush1.msra.mxu0 0.0
    %162 = vmatprep.subr.mxu0 0.0
    %163 = vmatpush1.msra.mxu0 0.0
    %164 = vmatprep.subr.mxu0 0.0
    %165 = vmatpush1.msra.mxu0 0.0
    %166 = vmatprep.subr.mxu0 0.0
    %167 = vmatpush1.msra.mxu0 0.0
    %168 = vmatprep.subr.mxu0 0.0
    %169 = vmatpush1.msra.mxu0 0.0
    %170 = vmatprep.subr.mxu0 0.0
    %171 = vmatpush1.msra.mxu0 0.0
    %172 = vmatprep.subr.mxu0 0.0
    %173 = vmatpush1.msra.mxu0 0.0
    %174 = vmatprep.subr.mxu0 0.0
    %175 = vmatpush1.msra.mxu0 0.0
    %176 = vmatprep.subr.mxu0 0.0
    %177 = vmatpush1.msra.mxu0 0.0
    %178 = vmatprep.subr.mxu0 0.0
    %179 = vmatpush1.msra.mxu0 0.0
    %180 = vmatprep.subr.mxu0 0.0
    %181 = vmatpush1.msra.mxu0 0.0
    %182 = vmatprep.subr.mxu0 0.0
    %183 = vmatpush1.msra.mxu0 0.0
    %184 = vmatprep.subr.mxu0 0.0
    %185 = vmatpush1.msra.mxu0 0.0
    %186 = vmatprep.subr.mxu0 0.0
    %187 = vmatpush1.msra.mxu0 0.0
    %188 = vmatprep.mubr.f32.mxu0 0.0
    %189 = vmatmul.mubr.f32.gmra.mrb[0].mxu0 %v122
    %v190 = vpop.f32.mrb[0].mxu0
    %v191 = vadd.f32 %v118, %v190
    %v192 = vpop.f32.mrb[0].mxu0
    %193 = vdwg.mxu0
    %vm194 = vcmp.gt.f32.partialorder %v191, 0.0
    %v195 = vmin.f32 %v191, 0.0
    %v196 = vrcp.pop 0.06
    %v197 = vmul.f32 %v195, %v196
    %v198 = vmul.f32 %v197, 1.442695
    %v199 = vpow.pop %v198
    %v200 = vsub.f32 %v199, 1.0
    %v201 = vmul.f32 %v200, 0.06
    %v202 = vsel %vm194, %v191, %v201
    %v203 = vld [vmem:[%s3] sm:$0xff]
    %v204 = vld [vmem:[%s3 + $0x8] sm:$0xff]
    %v205 = vld [vmem:[%s3 + $0x10] sm:$0xff]
    %v206 = vld [vmem:[%s3 + $0x18] sm:$0xff]
    %v207 = vld [vmem:[#allocation8] sm:$0x1]
    %v209 = vlaneseq
    %v210 = vshrl.u32 %v209, 7
    %v211 = vsub.s32 0, %v210
    %v212 = vrot.slane %v207, %v211
    %vm214 = vcmask 261120
    %v216 = vsel %vm214, %v202, 0
    %218 = vmatprep.subr.mxu0 0.0
    %219 = vmatpush1.msra.mxu0 %v203
    %220 = vmatprep.subr.mxu0 0.0
    %221 = vmatpush1.msra.mxu0 %v204
    %222 = vmatprep.subr.mxu0 0.0
    %223 = vmatpush1.msra.mxu0 %v205
    %224 = vmatprep.subr.mxu0 0.0
    %225 = vmatpush1.msra.mxu0 %v206
    %226 = vmatprep.subr.mxu0 0.0
    %227 = vmatpush1.msra.mxu0 0.0
    %228 = vmatprep.subr.mxu0 0.0
    %229 = vmatpush1.msra.mxu0 0.0
    %230 = vmatprep.subr.mxu0 0.0
    %231 = vmatpush1.msra.mxu0 0.0
    %232 = vmatprep.subr.mxu0 0.0
    %233 = vmatpush1.msra.mxu0 0.0
    %234 = vmatprep.subr.mxu0 0.0
    %235 = vmatpush1.msra.mxu0 0.0
    %236 = vmatprep.subr.mxu0 0.0
    %237 = vmatpush1.msra.mxu0 0.0
    %238 = vmatprep.subr.mxu0 0.0
    %239 = vmatpush1.msra.mxu0 0.0
    %240 = vmatprep.subr.mxu0 0.0
    %241 = vmatpush1.msra.mxu0 0.0
    %242 = vmatprep.subr.mxu0 0.0
    %243 = vmatpush1.msra.mxu0 0.0
    %244 = vmatprep.subr.mxu0 0.0
    %245 = vmatpush1.msra.mxu0 0.0
    %246 = vmatprep.subr.mxu0 0.0
    %247 = vmatpush1.msra.mxu0 0.0
    %248 = vmatprep.subr.mxu0 0.0
    %249 = vmatpush1.msra.mxu0 0.0
    %250 = vmatprep.subr.mxu0 0.0
    %251 = vmatpush1.msra.mxu0 0.0
    %252 = vmatprep.subr.mxu0 0.0
    %253 = vmatpush1.msra.mxu0 0.0
    %254 = vmatprep.subr.mxu0 0.0
    %255 = vmatpush1.msra.mxu0 0.0
    %256 = vmatprep.subr.mxu0 0.0
    %257 = vmatpush1.msra.mxu0 0.0
    %258 = vmatprep.subr.mxu0 0.0
    %259 = vmatpush1.msra.mxu0 0.0
    %260 = vmatprep.subr.mxu0 0.0
    %261 = vmatpush1.msra.mxu0 0.0
    %262 = vmatprep.subr.mxu0 0.0
    %263 = vmatpush1.msra.mxu0 0.0
    %264 = vmatprep.subr.mxu0 0.0
    %265 = vmatpush1.msra.mxu0 0.0
    %266 = vmatprep.subr.mxu0 0.0
    %267 = vmatpush1.msra.mxu0 0.0
    %268 = vmatprep.subr.mxu0 0.0
    %269 = vmatpush1.msra.mxu0 0.0
    %270 = vmatprep.subr.mxu0 0.0
    %271 = vmatpush1.msra.mxu0 0.0
    %272 = vmatprep.subr.mxu0 0.0
    %273 = vmatpush1.msra.mxu0 0.0
    %274 = vmatprep.subr.mxu0 0.0
    %275 = vmatpush1.msra.mxu0 0.0
    %276 = vmatprep.subr.mxu0 0.0
    %277 = vmatpush1.msra.mxu0 0.0
    %278 = vmatprep.subr.mxu0 0.0
    %279 = vmatpush1.msra.mxu0 0.0
    %280 = vmatprep.subr.mxu0 0.0
    %281 = vmatpush1.msra.mxu0 0.0
    %282 = vmatprep.mubr.f32.mxu0 0.0
    %283 = vmatmul.mubr.f32.gmra.mrb[0].mxu0 %v216
    %v284 = vpop.f32.mrb[0].mxu0
    %v285 = vadd.f32 %v212, %v284
    %v286 = vpop.f32.mrb[0].mxu0
    %287 = vdwg.mxu0
    %v288 = vmax.f32 %v285, 0.0
    %v289 = vld [vmem:[%s5] sm:$0xff]
    %v290 = vld [vmem:[%s5 + $0x8] sm:$0xff]
    %v291 = vld [vmem:[%s5 + $0x10] sm:$0xff]
    %v292 = vld [vmem:[%s5 + $0x18] sm:$0xff]
    %v293 = vld [vmem:[%s5 + $0x20] sm:$0xff]
    %v294 = vld [vmem:[%s5 + $0x28] sm:$0xff]
    %v295 = vld [vmem:[%s5 + $0x30] sm:$0xff]
    %v296 = vld [vmem:[%s5 + $0x38] sm:$0xff]
    %v297 = vld [vmem:[#allocation9] sm:$0x1]
    %v299 = vlaneseq
    %v300 = vshrl.u32 %v299, 7
    %v301 = vsub.s32 0, %v300
    %v302 = vrot.slane %v297, %v301
    %vm304 = vcmask 523264
    %v306 = vsel %vm304, %v288, 0
    %308 = vmatprep.subr.mxu0 0.0
    %309 = vmatpush1.msra.mxu0 %v289
    %310 = vmatprep.subr.mxu0 0.0
    %311 = vmatpush1.msra.mxu0 %v290
    %312 = vmatprep.subr.mxu0 0.0
    %313 = vmatpush1.msra.mxu0 %v291
    %314 = vmatprep.subr.mxu0 0.0
    %315 = vmatpush1.msra.mxu0 %v292
    %316 = vmatprep.subr.mxu0 0.0
    %317 = vmatpush1.msra.mxu0 %v293
    %318 = vmatprep.subr.mxu0 0.0
    %319 = vmatpush1.msra.mxu0 %v294
    %320 = vmatprep.subr.mxu0 0.0
    %321 = vmatpush1.msra.mxu0 %v295
    %322 = vmatprep.subr.mxu0 0.0
    %323 = vmatpush1.msra.mxu0 %v296
    %324 = vmatprep.subr.mxu0 0.0
    %325 = vmatpush1.msra.mxu0 0.0
    %326 = vmatprep.subr.mxu0 0.0
    %327 = vmatpush1.msra.mxu0 0.0
    %328 = vmatprep.subr.mxu0 0.0
    %329 = vmatpush1.msra.mxu0 0.0
    %330 = vmatprep.subr.mxu0 0.0
    %331 = vmatpush1.msra.mxu0 0.0
    %332 = vmatprep.subr.mxu0 0.0
    %333 = vmatpush1.msra.mxu0 0.0
    %334 = vmatprep.subr.mxu0 0.0
    %335 = vmatpush1.msra.mxu0 0.0
    %336 = vmatprep.subr.mxu0 0.0
    %337 = vmatpush1.msra.mxu0 0.0
    %338 = vmatprep.subr.mxu0 0.0
    %339 = vmatpush1.msra.mxu0 0.0
    %340 = vmatprep.subr.mxu0 0.0
    %341 = vmatpush1.msra.mxu0 0.0
    %342 = vmatprep.subr.mxu0 0.0
    %343 = vmatpush1.msra.mxu0 0.0
    %344 = vmatprep.subr.mxu0 0.0
    %345 = vmatpush1.msra.mxu0 0.0
    %346 = vmatprep.subr.mxu0 0.0
    %347 = vmatpush1.msra.mxu0 0.0
    %348 = vmatprep.subr.mxu0 0.0
    %349 = vmatpush1.msra.mxu0 0.0
    %350 = vmatprep.subr.mxu0 0.0
    %351 = vmatpush1.msra.mxu0 0.0
    %352 = vmatprep.subr.mxu0 0.0
    %353 = vmatpush1.msra.mxu0 0.0
    %354 = vmatprep.subr.mxu0 0.0
    %355 = vmatpush1.msra.mxu0 0.0
    %356 = vmatprep.subr.mxu0 0.0
    %357 = vmatpush1.msra.mxu0 0.0
    %358 = vmatprep.subr.mxu0 0.0
    %359 = vmatpush1.msra.mxu0 0.0
    %360 = vmatprep.subr.mxu0 0.0
    %361 = vmatpush1.msra.mxu0 0.0
    %362 = vmatprep.subr.mxu0 0.0
    %363 = vmatpush1.msra.mxu0 0.0
    %364 = vmatprep.subr.mxu0 0.0
    %365 = vmatpush1.msra.mxu0 0.0
    %366 = vmatprep.subr.mxu0 0.0
    %367 = vmatpush1.msra.mxu0 0.0
    %368 = vmatprep.subr.mxu0 0.0
    %369 = vmatpush1.msra.mxu0 0.0
    %370 = vmatprep.subr.mxu0 0.0
    %371 = vmatpush1.msra.mxu0 0.0
    %372 = vmatprep.mubr.f32.mxu0 0.0
    %373 = vmatmul.mubr.f32.gmra.mrb[0].mxu0 %v306
    %v374 = vpop.f32.mrb[0].mxu0
    %v375 = vadd.f32 %v302, %v374
    %v376 = vpop.f32.mrb[0].mxu0
    %377 = vdwg.mxu0
    %v378 = vmax.f32 %v375, 0.0
    %v379 = vld [vmem:[%s7] sm:$0xff]
    %v380 = vld [vmem:[%s7 + $0x8] sm:$0xff]
    %v381 = vld [vmem:[%s7 + $0x10] sm:$0xff]
    %v382 = vld [vmem:[%s7 + $0x18] sm:$0xff]
    %v383 = vld [vmem:[#allocation11] sm:$0x1]
    %v385 = vlaneseq
    %v386 = vshrl.u32 %v385, 7
    %v387 = vsub.s32 0, %v386
    %v388 = vrot.slane %v383, %v387
    %v391 = vsel %vm214, %v378, 0
    %393 = vmatprep.subr.mxu0 0.0
    %394 = vmatpush1.msra.mxu0 %v379
    %395 = vmatprep.subr.mxu0 0.0
    %396 = vmatpush1.msra.mxu0 %v380
    %397 = vmatprep.subr.mxu0 0.0
    %398 = vmatpush1.msra.mxu0 %v381
    %399 = vmatprep.subr.mxu0 0.0
    %400 = vmatpush1.msra.mxu0 %v382
    %401 = vmatprep.subr.mxu0 0.0
    %402 = vmatpush1.msra.mxu0 0.0
    %403 = vmatprep.subr.mxu0 0.0
    %404 = vmatpush1.msra.mxu0 0.0
    %405 = vmatprep.subr.mxu0 0.0
    %406 = vmatpush1.msra.mxu0 0.0
    %407 = vmatprep.subr.mxu0 0.0
    %408 = vmatpush1.msra.mxu0 0.0
    %409 = vmatprep.subr.mxu0 0.0
    %410 = vmatpush1.msra.mxu0 0.0
    %411 = vmatprep.subr.mxu0 0.0
    %412 = vmatpush1.msra.mxu0 0.0
    %413 = vmatprep.subr.mxu0 0.0
    %414 = vmatpush1.msra.mxu0 0.0
    %415 = vmatprep.subr.mxu0 0.0
    %416 = vmatpush1.msra.mxu0 0.0
    %417 = vmatprep.subr.mxu0 0.0
    %418 = vmatpush1.msra.mxu0 0.0
    %419 = vmatprep.subr.mxu0 0.0
    %420 = vmatpush1.msra.mxu0 0.0
    %421 = vmatprep.subr.mxu0 0.0
    %422 = vmatpush1.msra.mxu0 0.0
    %423 = vmatprep.subr.mxu0 0.0
    %424 = vmatpush1.msra.mxu0 0.0
    %425 = vmatprep.subr.mxu0 0.0
    %426 = vmatpush1.msra.mxu0 0.0
    %427 = vmatprep.subr.mxu0 0.0
    %428 = vmatpush1.msra.mxu0 0.0
    %429 = vmatprep.subr.mxu0 0.0
    %430 = vmatpush1.msra.mxu0 0.0
    %431 = vmatprep.subr.mxu0 0.0
    %432 = vmatpush1.msra.mxu0 0.0
    %433 = vmatprep.subr.mxu0 0.0
    %434 = vmatpush1.msra.mxu0 0.0
    %435 = vmatprep.subr.mxu0 0.0
    %436 = vmatpush1.msra.mxu0 0.0
    %437 = vmatprep.subr.mxu0 0.0
    %438 = vmatpush1.msra.mxu0 0.0
    %439 = vmatprep.subr.mxu0 0.0
    %440 = vmatpush1.msra.mxu0 0.0
    %441 = vmatprep.subr.mxu0 0.0
    %442 = vmatpush1.msra.mxu0 0.0
    %443 = vmatprep.subr.mxu0 0.0
    %444 = vmatpush1.msra.mxu0 0.0
    %445 = vmatprep.subr.mxu0 0.0
    %446 = vmatpush1.msra.mxu0 0.0
    %447 = vmatprep.subr.mxu0 0.0
    %448 = vmatpush1.msra.mxu0 0.0
    %449 = vmatprep.subr.mxu0 0.0
    %450 = vmatpush1.msra.mxu0 0.0
    %451 = vmatprep.subr.mxu0 0.0
    %452 = vmatpush1.msra.mxu0 0.0
    %453 = vmatprep.subr.mxu0 0.0
    %454 = vmatpush1.msra.mxu0 0.0
    %455 = vmatprep.subr.mxu0 0.0
    %456 = vmatpush1.msra.mxu0 0.0
    %457 = vmatprep.mubr.f32.mxu0 0.0
    %458 = vmatmul.mubr.f32.gmra.mrb[0].mxu0 %v391
    %v459 = vpop.f32.mrb[0].mxu0
    %v460 = vadd.f32 %v388, %v459
    %v461 = vpop.f32.mrb[0].mxu0
    %462 = vdwg.mxu0
    %v463 = vmax.f32 %v460, 0.0
    %v464 = vld [vmem:[%s9] sm:$0xff]
    %v465 = vld [vmem:[%s9 + $0x8] sm:$0xff]
    %v466 = vld [vmem:[%s9 + $0x10] sm:$0xff]
    %v467 = vld [vmem:[%s9 + $0x18] sm:$0xff]
    %v468 = vld [vmem:[%s10] sm:$0x1]
    %v470 = vlaneseq
    %v471 = vshrl.u32 %v470, 7
    %v472 = vsub.s32 0, %v471
    %v473 = vrot.slane %v468, %v472
    %v476 = vsel %vm214, %v463, 0
    %478 = vmatprep.subr.mxu0 0.0
    %479 = vmatpush1.msra.mxu0 %v464
    %480 = vmatprep.subr.mxu0 0.0
    %481 = vmatpush1.msra.mxu0 %v465
    %482 = vmatprep.subr.mxu0 0.0
    %483 = vmatpush1.msra.mxu0 %v466
    %484 = vmatprep.subr.mxu0 0.0
    %485 = vmatpush1.msra.mxu0 %v467
    %486 = vmatprep.subr.mxu0 0.0
    %487 = vmatpush1.msra.mxu0 0.0
    %488 = vmatprep.subr.mxu0 0.0
    %489 = vmatpush1.msra.mxu0 0.0
    %490 = vmatprep.subr.mxu0 0.0
    %491 = vmatpush1.msra.mxu0 0.0
    %492 = vmatprep.subr.mxu0 0.0
    %493 = vmatpush1.msra.mxu0 0.0
    %494 = vmatprep.subr.mxu0 0.0
    %495 = vmatpush1.msra.mxu0 0.0
    %496 = vmatprep.subr.mxu0 0.0
    %497 = vmatpush1.msra.mxu0 0.0
    %498 = vmatprep.subr.mxu0 0.0
    %499 = vmatpush1.msra.mxu0 0.0
    %500 = vmatprep.subr.mxu0 0.0
    %501 = vmatpush1.msra.mxu0 0.0
    %502 = vmatprep.subr.mxu0 0.0
    %503 = vmatpush1.msra.mxu0 0.0
    %504 = vmatprep.subr.mxu0 0.0
    %505 = vmatpush1.msra.mxu0 0.0
    %506 = vmatprep.subr.mxu0 0.0
    %507 = vmatpush1.msra.mxu0 0.0
    %508 = vmatprep.subr.mxu0 0.0
    %509 = vmatpush1.msra.mxu0 0.0
    %510 = vmatprep.subr.mxu0 0.0
    %511 = vmatpush1.msra.mxu0 0.0
    %512 = vmatprep.subr.mxu0 0.0
    %513 = vmatpush1.msra.mxu0 0.0
    %514 = vmatprep.subr.mxu0 0.0
    %515 = vmatpush1.msra.mxu0 0.0
    %516 = vmatprep.subr.mxu0 0.0
    %517 = vmatpush1.msra.mxu0 0.0
    %518 = vmatprep.subr.mxu0 0.0
    %519 = vmatpush1.msra.mxu0 0.0
    %520 = vmatprep.subr.mxu0 0.0
    %521 = vmatpush1.msra.mxu0 0.0
    %522 = vmatprep.subr.mxu0 0.0
    %523 = vmatpush1.msra.mxu0 0.0
    %524 = vmatprep.subr.mxu0 0.0
    %525 = vmatpush1.msra.mxu0 0.0
    %526 = vmatprep.subr.mxu0 0.0
    %527 = vmatpush1.msra.mxu0 0.0
    %528 = vmatprep.subr.mxu0 0.0
    %529 = vmatpush1.msra.mxu0 0.0
    %530 = vmatprep.subr.mxu0 0.0
    %531 = vmatpush1.msra.mxu0 0.0
    %532 = vmatprep.subr.mxu0 0.0
    %533 = vmatpush1.msra.mxu0 0.0
    %534 = vmatprep.subr.mxu0 0.0
    %535 = vmatpush1.msra.mxu0 0.0
    %536 = vmatprep.subr.mxu0 0.0
    %537 = vmatpush1.msra.mxu0 0.0
    %538 = vmatprep.subr.mxu0 0.0
    %539 = vmatpush1.msra.mxu0 0.0
    %540 = vmatprep.subr.mxu0 0.0
    %541 = vmatpush1.msra.mxu0 0.0
    %542 = vmatprep.mubr.f32.mxu0 0.0
    %543 = vmatmul.mubr.f32.gmra.mrb[0].mxu0 %v476
    %v544 = vpop.f32.mrb[0].mxu0
    %v545 = vadd.f32 %v473, %v544
    %v546 = vpop.f32.mrb[0].mxu0
    %547 = vdwg.mxu0
    %v548 = vmax.f32 %v545, 0.0
    %v549 = vmul.f32 %v548, %v378
    %v550 = vld [vmem:[%s11] sm:$0xff]
    %v551 = vld [vmem:[%s11 + $0x8] sm:$0xff]
    %v552 = vld [vmem:[%s11 + $0x10] sm:$0xff]
    %v553 = vld [vmem:[%s11 + $0x18] sm:$0xff]
    %v555 = vsel %vm214, %v549, 0
    %557 = vmatprep.subr.mxu0 0.0
    %558 = vmatpush1.msra.mxu0 %v550
    %559 = vmatprep.subr.mxu0 0.0
    %560 = vmatpush1.msra.mxu0 %v551
    %561 = vmatprep.subr.mxu0 0.0
    %562 = vmatpush1.msra.mxu0 %v552
    %563 = vmatprep.subr.mxu0 0.0
    %564 = vmatpush1.msra.mxu0 %v553
    %565 = vmatprep.subr.mxu0 0.0
    %566 = vmatpush1.msra.mxu0 0.0
    %567 = vmatprep.subr.mxu0 0.0
    %568 = vmatpush1.msra.mxu0 0.0
    %569 = vmatprep.subr.mxu0 0.0
    %570 = vmatpush1.msra.mxu0 0.0
    %571 = vmatprep.subr.mxu0 0.0
    %572 = vmatpush1.msra.mxu0 0.0
    %573 = vmatprep.subr.mxu0 0.0
    %574 = vmatpush1.msra.mxu0 0.0
    %575 = vmatprep.subr.mxu0 0.0
    %576 = vmatpush1.msra.mxu0 0.0
    %577 = vmatprep.subr.mxu0 0.0
    %578 = vmatpush1.msra.mxu0 0.0
    %579 = vmatprep.subr.mxu0 0.0
    %580 = vmatpush1.msra.mxu0 0.0
    %581 = vmatprep.subr.mxu0 0.0
    %582 = vmatpush1.msra.mxu0 0.0
    %583 = vmatprep.subr.mxu0 0.0
    %584 = vmatpush1.msra.mxu0 0.0
    %585 = vmatprep.subr.mxu0 0.0
    %586 = vmatpush1.msra.mxu0 0.0
    %587 = vmatprep.subr.mxu0 0.0
    %588 = vmatpush1.msra.mxu0 0.0
    %589 = vmatprep.subr.mxu0 0.0
    %590 = vmatpush1.msra.mxu0 0.0
    %591 = vmatprep.subr.mxu0 0.0
    %592 = vmatpush1.msra.mxu0 0.0
    %593 = vmatprep.subr.mxu0 0.0
    %594 = vmatpush1.msra.mxu0 0.0
    %595 = vmatprep.subr.mxu0 0.0
    %596 = vmatpush1.msra.mxu0 0.0
    %597 = vmatprep.subr.mxu0 0.0
    %598 = vmatpush1.msra.mxu0 0.0
    %599 = vmatprep.subr.mxu0 0.0
    %600 = vmatpush1.msra.mxu0 0.0
    %601 = vmatprep.subr.mxu0 0.0
    %602 = vmatpush1.msra.mxu0 0.0
    %603 = vmatprep.subr.mxu0 0.0
    %604 = vmatpush1.msra.mxu0 0.0
    %605 = vmatprep.subr.mxu0 0.0
    %606 = vmatpush1.msra.mxu0 0.0
    %607 = vmatprep.subr.mxu0 0.0
    %608 = vmatpush1.msra.mxu0 0.0
    %609 = vmatprep.subr.mxu0 0.0
    %610 = vmatpush1.msra.mxu0 0.0
    %611 = vmatprep.subr.mxu0 0.0
    %612 = vmatpush1.msra.mxu0 0.0
    %613 = vmatprep.subr.mxu0 0.0
    %614 = vmatpush1.msra.mxu0 0.0
    %615 = vmatprep.subr.mxu0 0.0
    %616 = vmatpush1.msra.mxu0 0.0
    %617 = vmatprep.subr.mxu0 0.0
    %618 = vmatpush1.msra.mxu0 0.0
    %619 = vmatprep.subr.mxu0 0.0
    %620 = vmatpush1.msra.mxu0 0.0
    %621 = vmatprep.mubr.f32.mxu0 0.0
    %622 = vmatmul.mubr.f32.gmra.mrb[0].mxu0 %v555
    %v623 = vpop.f32.mrb[0].mxu0
    %v624 = vadd.f32 0.0, %v623
    %v625 = vpop.f32.mrb[0].mxu0
    %626 = vdwg.mxu0
    %628 = vrot.lane.b32.xlu0 %v624, 112
    %v629 = vpop.permute.xlu0 %628
    %v631 = vmax.f32 %v624, %v629
    %633 = vrot.lane.b32.xlu0 %v631, 96
    %v634 = vpop.permute.xlu0 %633
    %v636 = vmax.f32 %v631, %v634
    %v637 = vld [vmem:[%s12] sm:$0x1]
    %v639 = vlaneseq
    %v640 = vshrl.u32 %v639, 7
    %v641 = vsub.s32 0, %v640
    %v642 = vrot.slane %v637, %v641
    %v644 = vmul.f32 %v636, %v642
    %vm645 = vcmask 123904
    %v646 = vsel %vm645, %v644, 0.0
    %647 = vadd.xlane.f32.xlu0 %v646
    %v648 = vpop.xlane.xlu0 %647
    %v649 = vld [vmem:[#allocation2] sm:$0x1]
    %v651 = vlaneseq
    %v652 = vshrl.u32 %v651, 7
    %v653 = vsub.s32 0, %v652
    %v654 = vrot.slane %v649, %v653
    %v656 = vadd.f32 %v648, %v654
    %658 = vset.pattern.permute.xlu0 0
    %659 = vperm.xlu0 %658, %v656
    %v660 = vpop.permute.xlu0 %659
    %662 = vst [vmem:[#allocation12] sm:$0x3] %v660
    // Predicated region
    $region78: #{tpu_custom_call.1} parent=1 // pred_check
      _
    $region79: #{tpu_custom_call.1} parent=1 // pred_check_branch
      %664 = sbr.rel (0) target = $region81
    $region80: #{tpu_custom_call.1} parent=1 // pred_region
      %s666 = ssub.s32 32, 32
      %667 = vsyncadd [#allocation5], %s666
      %s669 = sshll.u32 [#allocation12], 4
      %s670 = int_to_ptr.vmem [resolvable:$true] %s669
      %672 = dma.vmem_to_hbm [thread:$0]  %s670, 32, %s14, [#allocation5]
    $region81: #{tpu_custom_call.1} parent=1 // pred_fallthru
      _
    // Predicated region
    $region82: #{tpu_custom_call.1} parent=1 // pred_check
      _
    $region83: #{tpu_custom_call.1} parent=1 // pred_check_branch
      %674 = sbr.rel (0) target = $region85
    $region84: #{tpu_custom_call.1} parent=1 // pred_region
      %675 = dma.done [#allocation5], 32
    $region85: #{tpu_custom_call.1} parent=1 // pred_fallthru
      _
    %676 = vsyncpa [#allocation4], 1
    %677 = vsyncpa [#allocation7], 1
    %678 = vsyncpa [#allocation10], 1
    %679 = vsyncpa [#allocation5], 1

</llo_original>
